<compile_context>
chip_gen: v5e
topology: v5e:2x2
jax: 0.10.0
libtpu: 0.0.40
codegen_flags: <defaults>
</compile_context>

<pallas_src>
import functools
import math

import jax
import jax.numpy as jnp
from jax.experimental import pallas as pl
from jax.experimental.pallas import tpu as pltpu


def _round_up(x, m):
    return (x + m - 1) // m * m


def _vmem_capacity_bytes(default_bytes=64 << 20):
    """Physical VMEM per core; conservative 64 MiB fallback (v7x-sized) if unknown."""
    try:
        get_info = getattr(pltpu, "get_tpu_info", None)
        if get_info is None:
            return default_bytes
        cap = getattr(get_info(), "vmem_capacity_bytes", None)
        return int(cap) if cap else default_bytes
    except Exception:
        return default_bytes


def _vmem_estimate(tq, hwp, kc, vc, in_bytes, sim_bytes, ctx_bytes):
    """Rough per-step VMEM footprint (double-buffered blocks + f32 temporaries)."""
    f_buf = 2 * _round_up(kc, 16) * hwp * in_bytes          # key/query features (invariant)
    v_buf = 2 * _round_up(vc, 16) * hwp * in_bytes          # value features (invariant)
    sim_buf = 2 * tq * hwp * sim_bytes                      # sim output rows
    ctx_buf = 2 * _round_up(vc, 16) * _round_up(tq, 128) * ctx_bytes
    tmp = 3 * tq * hwp * 4                                  # sim / exp / p working tiles
    return f_buf + v_buf + sim_buf + ctx_buf + tmp


def _fused_attn_kernel(f_ref, v_ref, sim_ref, ctx_ref, *, hw_valid, approx_recip):
    # f_ref  : (Kc, HWp)  folded-BN, pre-scaled, ReLU'd Q/K features (bf16/f32)
    # v_ref  : (Vc, HWp)  value features
    # sim_ref: (TQ, HWp)  attention rows for this query tile
    # ctx_ref: (Vc, TQ)   context^T columns for this query tile
    tq, hwp = sim_ref.shape
    start = pl.multiple_of(pl.program_id(1) * tq, 128)

    fk = f_ref[...]                          # (Kc, HWp) keys (resident, invariant over q)
    fq = f_ref[:, pl.ds(start, tq)]          # (Kc, TQ)  query slice of the same block

    # sim (TQ, HWp) = fq^T @ fk -- contract the Kc axis; f32 accumulation on the MXU.
    sim = jax.lax.dot_general(fq, fk, (((0,), (0,)), ((), ())),
                              preferred_element_type=jnp.float32)

    if hwp != hw_valid:
        # Mask padded key columns so they get zero softmax weight.
        col = jax.lax.broadcasted_iota(jnp.int32, (tq, hwp), 1)
        sim = jnp.where(col < hw_valid, sim, jnp.float32(-1e30))

    # Exact row-wise softmax (the full key dimension is resident per tile).
    sim = sim - jnp.max(sim, axis=-1, keepdims=True)
    e = jnp.exp(sim)
    denom = jnp.sum(e, axis=-1, keepdims=True)
    if approx_recip:
        p = e * pl.reciprocal(denom, approx=True)            # EUP slot, ~free
    else:
        p = e / denom
    sim_ref[...] = p.astype(sim_ref.dtype)

    # context^T (Vc, TQ) = V (Vc, HWp) contracted with P (TQ, HWp) over HWp.
    v = v_ref[...]
    ctx_ref[...] = jax.lax.dot_general(
        v, p.astype(v.dtype), (((1,), (1,)), ((), ())),
        preferred_element_type=jnp.float32).astype(ctx_ref.dtype)


def self_attention_block_forward(
        x_nchw,
        key_w, key_b, bn_gamma, bn_beta, bn_mean, bn_var,
        val_w1, val_b1, val_w2, val_b2,
        *, bn_eps=1e-5, block_q=None, sim_dtype=jnp.float32,
        matmul_dtype=jnp.bfloat16, approx_recip=True):
    """SelfAttentionBlock_ forward (scale=1).

    x_nchw: (B, C, H, W). Returns (context (B, Vc, H, W), sim_map (B, HW, HW)).
    sim_dtype=jnp.bfloat16 is the fast path (halves the dominant sim writeback).
    """
    B, C, H, W = x_nchw.shape
    Kc = key_w.shape[0]
    Vc = val_w1.shape[0]
    HW = H * W
    HWp = _round_up(HW, 128)

    # ---- fold eval-mode BN and the Kc**-0.5 attention scale into the 1x1 conv ----
    bn_scale = bn_gamma / jnp.sqrt(bn_var + bn_eps)             # (Kc,)
    s = float(Kc) ** -0.25                                      # sqrt of Kc**-0.5 per operand
    w_fold = (key_w * bn_scale[:, None]) * s                    # (Kc, C)
    b_fold = ((key_b - bn_mean) * bn_scale + bn_beta) * s       # (Kc,)

    x_chw = x_nchw.reshape(B, C, HW)                            # pure reshape, no transpose

    # ---- shared Q/K features hoisted out of the kernel (computed once per batch) ----
    f = jnp.einsum('kc,bcn->bkn', w_fold, x_chw,
                   precision=jax.lax.Precision.HIGHEST)         # (B, Kc, HW)
    f = jnp.maximum(f + b_fold[None, :, None], 0.0)

    # ---- value branch f_value = ReLU(Conv1x1(ReLU(Conv3x3(x)))) ----
    # TODO(synk): the 3x3 convolution is left to XLA; attention + softmax + context matmul
    #             are fused in the Pallas kernel below.
    v = jax.lax.conv_general_dilated(
        x_nchw, val_w1, window_strides=(1, 1), padding=((1, 1), (1, 1)),
        dimension_numbers=('NCHW', 'OIHW', 'NCHW'))
    v = jnp.maximum(v + val_b1[None, :, None, None], 0.0)
    v = jnp.einsum('bchw,kc->bkhw', v, val_w2) + val_b2[None, :, None, None]
    v = jnp.maximum(v, 0.0).reshape(B, Vc, HW)

    # ---- bf16 MXU operands (f32 accumulation inside the kernel) ----
    f = f.astype(matmul_dtype)
    v = v.astype(matmul_dtype)

    # ---- pad HW to a multiple of 128 (masked softmax columns in-kernel) ----
    if HWp != HW:
        pad = HWp - HW
        f = jnp.pad(f, ((0, 0), (0, 0), (0, pad)))
        v = jnp.pad(v, ((0, 0), (0, 0), (0, pad)))

    # ---- chip-aware query-row tile size + VMEM limit ----
    in_bytes = jnp.dtype(matmul_dtype).itemsize
    sim_bytes = jnp.dtype(sim_dtype).itemsize
    ctx_bytes = jnp.dtype(x_nchw.dtype).itemsize
    budget = int(_vmem_capacity_bytes() * 0.8)                  # headroom for Mosaic scratch
    max_tq = min(block_q if block_q is not None else 1024, HWp)
    tq = 128
    t = 256
    while t <= max_tq:
        if HWp % t == 0 and _vmem_estimate(t, HWp, Kc, Vc,
                                           in_bytes, sim_bytes, ctx_bytes) <= budget:
            tq = t
        t += 128
    nq = HWp // tq

    est = _vmem_estimate(tq, HWp, Kc, Vc, in_bytes, sim_bytes, ctx_bytes)
    vmem_limit = int(max(32 << 20, min(budget, 2 * est + (8 << 20))))

    # ---- scheduling hints (feature recompute removed; invariant blocks DMA'd once/batch) --
    cost = pl.CostEstimate(
        flops=int(2 * B * HWp * HWp * (Kc + Vc)),
        transcendentals=int(B * HWp * HWp),
        bytes_accessed=int(B * (HWp * HWp * sim_bytes
                                + HWp * (Kc + Vc) * in_bytes
                                + Vc * HWp * ctx_bytes)))

    kernel = functools.partial(_fused_attn_kernel, hw_valid=HW, approx_recip=approx_recip)

    grid_spec = pltpu.PrefetchScalarGridSpec(
        num_scalar_prefetch=0,
        grid=(B, nq),
        in_specs=[
            pl.BlockSpec((None, Kc, HWp), lambda b, q: (b, 0, 0)),   # Q/K features (invariant)
            pl.BlockSpec((None, Vc, HWp), lambda b, q: (b, 0, 0)),   # value features (invariant)
        ],
        out_specs=[
            pl.BlockSpec((None, tq, HWp), lambda b, q: (b, q, 0)),   # sim rows (lane-dense)
            pl.BlockSpec((None, Vc, tq), lambda b, q: (b, 0, q)),    # context^T cols (lane-dense)
        ],
    )

    sim_p, ctx_t = pl.pallas_call(
        kernel,
        out_shape=(jax.ShapeDtypeStruct((B, HWp, HWp), sim_dtype),
                   jax.ShapeDtypeStruct((B, Vc, HWp), x_nchw.dtype)),
        grid_spec=grid_spec,
        compiler_params=pltpu.CompilerParams(
            dimension_semantics=("parallel", "parallel"),
            vmem_limit_bytes=vmem_limit),
        cost_estimate=cost,
    )(f, v)

    sim_map = sim_p if HWp == HW else sim_p[:, :HW, :HW]
    ctx_t = ctx_t if HWp == HW else ctx_t[:, :, :HW]
    context = ctx_t.reshape(B, Vc, H, W)                       # pure reshape
    return context, sim_map


def _reference(x, key_w, key_b, bn_g, bn_b, bn_m, bn_v,
               vw1, vb1, vw2, vb2, bn_eps=1e-5):
    B, C, H, W = x.shape
    Kc = key_w.shape[0]
    Vc = vw1.shape[0]
    HW = H * W
    hp = jax.lax.Precision.HIGHEST
    # f_key / f_query: 1x1 conv + BN (eval) + ReLU
    f = jnp.einsum('bchw,kc->bkhw', x, key_w, precision=hp) + key_b[None, :, None, None]
    f = (f - bn_m[None, :, None, None]) / jnp.sqrt(bn_v + bn_eps)[None, :, None, None]
    f = f * bn_g[None, :, None, None] + bn_b[None, :, None, None]
    f = jnp.maximum(f, 0.0).reshape(B, Kc, HW)
    q = jnp.transpose(f, (0, 2, 1))
    sim = jax.nn.softmax(jnp.einsum('bqk,bkh->bqh', q, f, precision=hp) * (Kc ** -0.5), axis=-1)
    # f_value (same XLA ops as the wrapper, default precision)
    v = jax.lax.conv_general_dilated(x, vw1, (1, 1), ((1, 1), (1, 1)),
                                     dimension_numbers=('NCHW', 'OIHW', 'NCHW'))
    v = jnp.maximum(v + vb1[None, :, None, None], 0.0)
    v = jnp.einsum('bchw,kc->bkhw', v, vw2) + vb2[None, :, None, None]
    v = jnp.maximum(v, 0.0).reshape(B, Vc, HW)
    ctx = jnp.einsum('bqh,bvh->bqv', sim, v, precision=hp)      # (B, HW, Vc)
    ctx = jnp.transpose(ctx, (0, 2, 1)).reshape(B, Vc, H, W)
    return ctx, sim


def _make_params(key, C, Kc, Vc):
    kw, kv1, kv2 = jax.random.split(key, 3)
    # parameter_initialization(): kaiming_normal_(relu), zero bias, BN weight=1 / bias=0,
    # fresh running stats (mean=0, var=1).
    key_w = jax.random.normal(kw, (Kc, C), jnp.float32) * math.sqrt(2.0 / C)
    key_b = jnp.zeros((Kc,), jnp.float32)
    bn_gamma = jnp.ones((Kc,), jnp.float32)
    bn_beta = jnp.zeros((Kc,), jnp.float32)
    bn_mean = jnp.zeros((Kc,), jnp.float32)
    bn_var = jnp.ones((Kc,), jnp.float32)
    val_w1 = jax.random.normal(kv1, (Vc, C, 3, 3), jnp.float32) * math.sqrt(2.0 / (C * 9))
    val_b1 = jnp.zeros((Vc,), jnp.float32)
    val_w2 = jax.random.normal(kv2, (Vc, Vc), jnp.float32) * math.sqrt(2.0 / Vc)
    val_b2 = jnp.zeros((Vc,), jnp.float32)
    return (key_w, key_b, bn_gamma, bn_beta, bn_mean, bn_var,
            val_w1, val_b1, val_w2, val_b2)


if __name__ == "__main__":
    B, C, Kc, Vc = 2, 4, 8, 8
    key = jax.random.PRNGKey(0)
    kx, kx2, kp = jax.random.split(key, 3)
    params = _make_params(kp, C, Kc, Vc)

    # ---- run 1: HW multiple of 128, bf16 fast path, query tiling exercised (grid (2, 2)) --
    H = W = 16
    x = jax.random.normal(kx, (B, C, H, W), dtype=jnp.float32)
    context, sim = self_attention_block_forward(x, *params, block_q=128)
    context = jax.block_until_ready(context)
    sim = jax.block_until_ready(sim)
    ctx_ref, sim_ref = _reference(x, *params)

    assert sim.shape == (B, H * W, H * W)
    assert context.shape == (B, Vc, H, W)
    assert bool(jnp.all(jnp.isfinite(sim))) and bool(jnp.all(jnp.isfinite(context)))
    # Tolerances reflect the intentional bf16-operand matmuls + approx EUP reciprocal.
    assert jnp.allclose(jnp.sum(sim, axis=-1), 1.0, atol=5e-3), "softmax rows do not sum to 1"
    assert jnp.allclose(sim, sim_ref, atol=3e-3, rtol=6e-2), "sim_map mismatch vs reference"
    assert jnp.allclose(context, ctx_ref, atol=5e-2, rtol=5e-2), "context mismatch vs reference"

    # ---- run 2: HW NOT a multiple of 128 (padding + masked softmax), f32 exact path -------
    H2 = W2 = 10
    x2 = jax.random.normal(kx2, (B, C, H2, W2), dtype=jnp.float32)
    context2, sim2 = self_attention_block_forward(
        x2, *params, matmul_dtype=jnp.float32, approx_recip=False)
    context2 = jax.block_until_ready(context2)
    sim2 = jax.block_until_ready(sim2)
    ctx_ref2, sim_ref2 = _reference(x2, *params)

    assert sim2.shape == (B, H2 * W2, H2 * W2)
    assert context2.shape == (B, Vc, H2, W2)
    assert jnp.allclose(jnp.sum(sim2, axis=-1), 1.0, atol=1e-4), "padded: rows do not sum to 1"
    assert jnp.allclose(sim2, sim_ref2, atol=1e-3, rtol=1e-3), "padded: sim_map mismatch"
    assert jnp.allclose(context2, ctx_ref2, atol=1e-3, rtol=1e-3), "padded: context mismatch"

    print("KERNEL_OK")
</pallas_src>

<mosaic_0001>
module attributes {stable_mosaic.version = 11 : i64} {
  func.func @_fused_attn_kernel(%arg0: i32, %arg1: i32, %arg2: memref<1x8x256xbf16, #tpu.memory_space<vmem>>, %arg3: memref<1x8x256xbf16, #tpu.memory_space<vmem>>, %arg4: memref<1x128x256xf32, #tpu.memory_space<vmem>>, %arg5: memref<1x8x128xf32, #tpu.memory_space<vmem>>) attributes {dimension_semantics = [#tpu.dimension_semantics<parallel>, #tpu.dimension_semantics<parallel>], iteration_bounds = array<i64: 2, 2>, scalar_prefetch = 0 : i64, scratch_operands = 0 : i64, tpu.core_type = #tpu.core_type<tc>, window_params = [{transform_indices = @transform_0, window_bounds = array<i64: 1, 8, 256>}, {transform_indices = @transform_1, window_bounds = array<i64: 1, 8, 256>}, {transform_indices = @transform_2, window_bounds = array<i64: 1, 128, 256>}, {transform_indices = @transform_3, window_bounds = array<i64: 1, 8, 128>}]} {
    %c128_i32 = arith.constant 128 : i32
    %0 = arith.muli %arg1, %c128_i32 : i32
    %1 = tpu.assume_multiple %0, 128 : i32
    %c0 = arith.constant 0 : index
    %c0_0 = arith.constant 0 : index
    %c0_1 = arith.constant 0 : index
    %2 = vector.load %arg2[%c0, %c0_0, %c0_1] : memref<1x8x256xbf16, #tpu.memory_space<vmem>>, vector<1x8x256xbf16>
    %3 = vector.shape_cast %2 : vector<1x8x256xbf16> to vector<8x256xbf16>
    %c0_2 = arith.constant 0 : index
    %c0_3 = arith.constant 0 : index
    %4 = arith.index_cast %1 : i32 to index
    %5 = vector.load %arg2[%c0_2, %c0_3, %4] : memref<1x8x256xbf16, #tpu.memory_space<vmem>>, vector<1x8x128xbf16>
    %6 = vector.shape_cast %5 : vector<1x8x128xbf16> to vector<8x128xbf16>
    %cst = arith.constant dense<0.000000e+00> : vector<128x256xf32>
    %7 = tpu.matmul %6, %3, %cst {dimension_numbers = #tpu.dot_dimension_numbers<[0], [0], [1], [1], [0, 1, 1, 1], [], []>} : vector<8x128xbf16>, vector<8x256xbf16>, vector<128x256xf32> -> vector<128x256xf32>
    %cst_4 = arith.constant dense<0xFF800000> : vector<128xf32>
    %8 = vector.multi_reduction <maximumf>, %7, %cst_4 [1] : vector<128x256xf32> to vector<128xf32>
    %9 = vector.shape_cast %8 : vector<128xf32> to vector<128x1xf32>
    %10 = vector.broadcast %9 : vector<128x1xf32> to vector<128x256xf32>
    %11 = arith.subf %7, %10 : vector<128x256xf32>
    %12 = math.exp %11 : vector<128x256xf32>
    %cst_5 = arith.constant dense<0.000000e+00> : vector<128xf32>
    %13 = vector.multi_reduction <add>, %12, %cst_5 [1] : vector<128x256xf32> to vector<128xf32>
    %14 = vector.shape_cast %13 : vector<128xf32> to vector<128x1xf32>
    %15 = tpu.reciprocal %14 {approx = true} : vector<128x1xf32> -> vector<128x1xf32>
    %16 = vector.broadcast %15 : vector<128x1xf32> to vector<128x256xf32>
    %17 = arith.mulf %12, %16 : vector<128x256xf32>
    %c0_6 = arith.constant 0 : index
    %c0_7 = arith.constant 0 : index
    %c0_8 = arith.constant 0 : index
    %18 = vector.load %arg4[%c0_6, %c0_7, %c0_8] : memref<1x128x256xf32, #tpu.memory_space<vmem>>, vector<1x128x256xf32>
    %19 = vector.shape_cast %18 : vector<1x128x256xf32> to vector<128x256xf32>
    %20 = vector.shape_cast %17 : vector<128x256xf32> to vector<1x128x256xf32>
    tpu.vector_store %arg4[%c0_6, %c0_7, %c0_8], %20 {strides = array<i32>} : memref<1x128x256xf32, #tpu.memory_space<vmem>>, vector<1x128x256xf32>,
    %c0_9 = arith.constant 0 : index
    %c0_10 = arith.constant 0 : index
    %c0_11 = arith.constant 0 : index
    %21 = vector.load %arg3[%c0_9, %c0_10, %c0_11] : memref<1x8x256xbf16, #tpu.memory_space<vmem>>, vector<1x8x256xbf16>
    %22 = vector.shape_cast %21 : vector<1x8x256xbf16> to vector<8x256xbf16>
    %23 = arith.truncf %17 : vector<128x256xf32> to vector<128x256xbf16>
    %cst_12 = arith.constant dense<0.000000e+00> : vector<8x128xf32>
    %24 = tpu.matmul %22, %23, %cst_12 {dimension_numbers = #tpu.dot_dimension_numbers<[1], [1], [0], [0], [0, 0, 1, 0], [], []>} : vector<8x256xbf16>, vector<128x256xbf16>, vector<8x128xf32> -> vector<8x128xf32>
    %c0_13 = arith.constant 0 : index
    %c0_14 = arith.constant 0 : index
    %c0_15 = arith.constant 0 : index
    %25 = vector.load %arg5[%c0_13, %c0_14, %c0_15] : memref<1x8x128xf32, #tpu.memory_space<vmem>>, vector<1x8x128xf32>
    %26 = vector.shape_cast %25 : vector<1x8x128xf32> to vector<8x128xf32>
    %27 = vector.shape_cast %24 : vector<8x128xf32> to vector<1x8x128xf32>
    tpu.vector_store %arg5[%c0_13, %c0_14, %c0_15], %27 {strides = array<i32>} : memref<1x8x128xf32, #tpu.memory_space<vmem>>, vector<1x8x128xf32>,
    return
  }
  func.func @transform_0(%arg0: i32, %arg1: i32) -> (i32, i32, i32) {
    %c0_i32 = arith.constant 0 : i32
    %c0_i32_0 = arith.constant 0 : i32
    %c0_i32_1 = arith.constant 0 : i32
    return %arg0, %c0_i32, %c0_i32_0 : i32, i32, i32
  }
  func.func @transform_1(%arg0: i32, %arg1: i32) -> (i32, i32, i32) {
    %c0_i32 = arith.constant 0 : i32
    %c0_i32_0 = arith.constant 0 : i32
    %c0_i32_1 = arith.constant 0 : i32
    return %arg0, %c0_i32, %c0_i32_0 : i32, i32, i32
  }
  func.func @transform_2(%arg0: i32, %arg1: i32) -> (i32, i32, i32) {
    %c0_i32 = arith.constant 0 : i32
    %c0_i32_0 = arith.constant 0 : i32
    return %arg0, %arg1, %c0_i32 : i32, i32, i32
  }
  func.func @transform_3(%arg0: i32, %arg1: i32) -> (i32, i32, i32) {
    %c0_i32 = arith.constant 0 : i32
    %c0_i32_0 = arith.constant 0 : i32
    return %arg0, %c0_i32, %arg1 : i32, i32, i32
  }
}

</mosaic_0001>

<llo_original>
// kernel: tpu_custom_call.1
$region0: #{tpu_custom_call.1}
  #allocation0 [shape = 'u32[]', space=smem, size = 0x4, offset = 0x4, fixed_abs, tag = 'smem constant byte address 0x4 - core index']
  #allocation1 [shape = 'u32[72,128]{1,0:T(1,128)}', space=vmem, size = 0x9000, scoped, tag = 'internal scratch']
  %s0 = inlined_call_operand.hbm [shape: bf16[2,8,256], index: 0, kind: input, shape index: {}]
  %s1 = inlined_call_operand.hbm [shape: bf16[2,8,256], index: 1, kind: input, shape index: {}]
  %s2 = inlined_call_operand.hbm [shape: f32[2,256,256], index: 2, kind: output, shape index: {0}]
  %s3 = inlined_call_operand.hbm [shape: f32[2,8,256], index: 3, kind: output, shape index: {1}]
  %4 = xla_tuple %s2, %s3
  %s5 = sld [smem:[#allocation0]]
  $region57: #{tpu_custom_call.1} parent=0
    _
  %s7 = ssub.s32 1, %s5
  %s8 = scalar_select 0, %s7, %s5
  $region1: #{tpu_custom_call.1} parent=0
    #allocation2 [shape = 'u8[8192]{0}', space=vmem, size = 0x2000, scoped, tag = 'input window, operand 0']
    #allocation3 [shape = 's32[2]{0}', space=sflag, size = 0x8, scoped, tag = 'scoped memory for tpu_custom_call.1']
    #allocation4 [shape = 's32[2]{0}', space=sflag, size = 0x8, scoped, tag = 'scoped memory for tpu_custom_call.1']
    #allocation5 [shape = 'u8[8192]{0}', space=vmem, size = 0x2000, scoped, tag = 'input window, operand 1']
    #allocation6 [shape = 's32[2]{0}', space=sflag, size = 0x8, scoped, tag = 'scoped memory for tpu_custom_call.1']
    #allocation7 [shape = 'u8[262144]{0}', space=vmem, size = 0x40000, scoped, tag = 'output window, operand 0']
    #allocation8 [shape = 'u8[8192]{0}', space=vmem, size = 0x2000, scoped, tag = 'output window, operand 1']
    #allocation9 [shape = 's32[2]{0}', space=sflag, size = 0x8, scoped, tag = 'scoped memory for tpu_custom_call.1']
    %9 = vsyncpa [#allocation3], 0
    %s10 = scalar_lea.sflag [#allocation3], 1
    %11 = vsyncpa %s10, 0
    %12 = vsyncpa [#allocation6], 0
    %s13 = scalar_lea.sflag [#allocation6], 1
    %14 = vsyncpa %s13, 0
    %15 = vsyncpa [#allocation4], 0
    %s16 = scalar_lea.sflag [#allocation4], 1
    %17 = vsyncpa %s16, 0
    %18 = vsyncpa [#allocation9], 0
    %s19 = scalar_lea.sflag [#allocation9], 1
    %20 = vsyncpa %s19, 0
    loop: start=0, step=1, limit=6
    $region2: #{tpu_custom_call.1} parent=1 // loop_pre_header
      _
    $region3: #{tpu_custom_call.1} parent=1 // loop_header
      %s22 = sphi 0, %s26
      %p23 = scmp.ge.s32.totalorder %s22, 6
      %s29 = sphi 0, %s41
      %s30 = sphi 0, %s37
      %s31 = sphi 0, %s29
      %s32 = sphi 0, %s30
      %s33 = sphi 0, %s31
      %s34 = sphi 0, %s32
      %s44 = sphi 0, %s46
      %s47 = sphi 0, %s44
      %s48 = sphi 0, %s47
      %s64 = sphi 0, %s48
      %s70 = sphi 0, %s72
      %s73 = sphi 0, %s70
      %s74 = sphi 0, %s73
      %s90 = sphi 0, %s74
      %s98 = sphi 0, %s100
      %s101 = sphi 0, %s98
      %s102 = sphi 0, %s101
      %s118 = sphi 0, %s102
      %s126 = sphi 0, %s128
      %s129 = sphi 0, %s126
      %s130 = sphi 0, %s129
      %s146 = sphi 0, %s130
    $region4: #{tpu_custom_call.1} parent=1 // loop_header_branch
      %25 = sbr.rel (%p23) target = $region8
    $region5: #{tpu_custom_call.1} parent=1 // loop_body
      %s27 = ssub.s32 %s22, 1
      %s28 = ssub.s32 %s22, 2
      %s35 = sadd.s32 1, %s30
      %p36 = scmp.ge.s32.totalorder %s35, 2
      %s37 = scalar_select %p36, 0, %s35
      %s38 = sadd.s32 1, %s29
      %s39 = scalar_select %p36, %s38, %s29
      %p40 = scmp.ge.s32.totalorder %s39, 2
      %s41 = scalar_select %p40, 0, %s39
      %s42 = ssub.s32 %s29, %s41
      %p43 = scmp.eq.s32.totalorder %s42, 0
      %s45 = sadd.s32 %s44, 1
      %s46 = scalar_select %p43, %s44, %s45
      %p49 = pneg %p43
      %p50 = scmp.eq.s32.totalorder %s22, 3
      %p51 = por %p49, %p50
      %p52 = scmp.ne.s32.totalorder %s44, %s47
      %p53 = scmp.eq.s32.totalorder %s22, 0
      %p54 = por %p52, %p53
      %p55 = scmp.ne.s32.totalorder %s44, %s47
      %p56 = scmp.eq.s32.totalorder %s27, 3
      %p57 = por %p55, %p56
      %p58 = scmp.ne.s32.totalorder %s47, %s48
      %p59 = scmp.eq.s32.totalorder %s27, 0
      %p60 = por %p58, %p59
      %p61 = scmp.ne.s32.totalorder %s47, %s48
      %p62 = scmp.eq.s32.totalorder %s28, 3
      %p63 = por %p61, %p62
      %p65 = scmp.ne.s32.totalorder %s48, %s64
      %p66 = scmp.eq.s32.totalorder %s28, 0
      %p67 = por %p65, %p66
      %s68 = ssub.s32 %s29, %s41
      %p69 = scmp.eq.s32.totalorder %s68, 0
      %s71 = sadd.s32 %s70, 1
      %s72 = scalar_select %p69, %s70, %s71
      %p75 = pneg %p69
      %p76 = scmp.eq.s32.totalorder %s22, 3
      %p77 = por %p75, %p76
      %p78 = scmp.ne.s32.totalorder %s70, %s73
      %p79 = scmp.eq.s32.totalorder %s22, 0
      %p80 = por %p78, %p79
      %p81 = scmp.ne.s32.totalorder %s70, %s73
      %p82 = scmp.eq.s32.totalorder %s27, 3
      %p83 = por %p81, %p82
      %p84 = scmp.ne.s32.totalorder %s73, %s74
      %p85 = scmp.eq.s32.totalorder %s27, 0
      %p86 = por %p84, %p85
      %p87 = scmp.ne.s32.totalorder %s73, %s74
      %p88 = scmp.eq.s32.totalorder %s28, 3
      %p89 = por %p87, %p88
      %p91 = scmp.ne.s32.totalorder %s74, %s90
      %p92 = scmp.eq.s32.totalorder %s28, 0
      %p93 = por %p91, %p92
      %s94 = ssub.s32 %s29, %s41
      %s95 = ssub.s32 %s30, %s37
      %s96 = sor.u32 %s94, %s95
      %p97 = scmp.eq.s32.totalorder %s96, 0
      %s99 = sadd.s32 %s98, 1
      %s100 = scalar_select %p97, %s98, %s99
      %p103 = pneg %p97
      %p104 = scmp.eq.s32.totalorder %s22, 3
      %p105 = por %p103, %p104
      %p106 = scmp.ne.s32.totalorder %s98, %s101
      %p107 = scmp.eq.s32.totalorder %s22, 0
      %p108 = por %p106, %p107
      %p109 = scmp.ne.s32.totalorder %s98, %s101
      %p110 = scmp.eq.s32.totalorder %s27, 3
      %p111 = por %p109, %p110
      %p112 = scmp.ne.s32.totalorder %s101, %s102
      %p113 = scmp.eq.s32.totalorder %s27, 0
      %p114 = por %p112, %p113
      %p115 = scmp.ne.s32.totalorder %s101, %s102
      %p116 = scmp.eq.s32.totalorder %s28, 3
      %p117 = por %p115, %p116
      %p119 = scmp.ne.s32.totalorder %s102, %s118
      %p120 = scmp.eq.s32.totalorder %s28, 0
      %p121 = por %p119, %p120
      %s122 = ssub.s32 %s29, %s41
      %s123 = ssub.s32 %s30, %s37
      %s124 = sor.u32 %s122, %s123
      %p125 = scmp.eq.s32.totalorder %s124, 0
      %s127 = sadd.s32 %s126, 1
      %s128 = scalar_select %p125, %s126, %s127
      %p131 = pneg %p125
      %p132 = scmp.eq.s32.totalorder %s22, 3
      %p133 = por %p131, %p132
      %p134 = scmp.ne.s32.totalorder %s126, %s129
      %p135 = scmp.eq.s32.totalorder %s22, 0
      %p136 = por %p134, %p135
      %p137 = scmp.ne.s32.totalorder %s126, %s129
      %p138 = scmp.eq.s32.totalorder %s27, 3
      %p139 = por %p137, %p138
      %p140 = scmp.ne.s32.totalorder %s129, %s130
      %p141 = scmp.eq.s32.totalorder %s27, 0
      %p142 = por %p140, %p141
      %p143 = scmp.ne.s32.totalorder %s129, %s130
      %p144 = scmp.eq.s32.totalorder %s28, 3
      %p145 = por %p143, %p144
      %p147 = scmp.ne.s32.totalorder %s130, %s146
      %p148 = scmp.eq.s32.totalorder %s28, 0
      %p149 = por %p147, %p148
      %p150 = scmp.le.s32.totalorder 1, %s22
      %p151 = scmp.lt.s32.totalorder %s22, 5
      %p152 = pnand %p150, %p151
      %p153 = pneg %p152
      // Predicated region
      $region9: #{tpu_custom_call.1} parent=5 // pred_check
        _
      $region10: #{tpu_custom_call.1} parent=5 // pred_check_branch
        %155 = sbr.rel (%p152) target = $region12
      $region11: #{tpu_custom_call.1} parent=5 // pred_region
        %s156 = ssub.s32 %s22, 1
      $region12: #{tpu_custom_call.1} parent=5 // pred_fallthru
        _
      %p157 = scmp.lt.s32.totalorder %s22, 4
      // Predicated region
      $region13: #{tpu_custom_call.1} parent=5 // pred_check
        %p158 = pneg %p157
      $region14: #{tpu_custom_call.1} parent=5 // pred_check_branch
        %160 = sbr.rel (%p158) target = $region16
      $region15: #{tpu_custom_call.1} parent=5 // pred_region
        // Predicated region
        $region17: #{tpu_custom_call.1} parent=15 // pred_check
          %p161 = pneg %p54
        $region18: #{tpu_custom_call.1} parent=15 // pred_check_branch
          %163 = sbr.rel (%p161) target = $region20
        $region19: #{tpu_custom_call.1} parent=15 // pred_region
          %s164 = sand.u32 %s44, 1
          %s165 = scalar_lea.sflag [#allocation3], %s164
          %s166 = sand.u32 %s44, 1
          %s167 = smul.addr %s166, 8
          %s168 = scalar_lea.vmem [#allocation2], %s167
          %170 = vsyncadd %s165, 0
          %s171 = smul.addr %s29, 2
          %s172 = smul.addr %s171, 4
          %s173 = scalar_lea.hbm %s0, %s172
          %s175 = sshll.u32 %s173, 4
          %s176 = int_to_ptr.hbm [resolvable:$true] %s175
          %s177 = sshll.u32 %s168, 4
          %s178 = int_to_ptr.vmem [resolvable:$true] %s177
          %180 = dma.hbm_to_vmem [thread:$0]  %s176, 128, %s178, %s165
        $region20: #{tpu_custom_call.1} parent=15 // pred_fallthru
          _
        // Predicated region
        $region21: #{tpu_custom_call.1} parent=15 // pred_check
          %p181 = pneg %p80
        $region22: #{tpu_custom_call.1} parent=15 // pred_check_branch
          %183 = sbr.rel (%p181) target = $region24
        $region23: #{tpu_custom_call.1} parent=15 // pred_region
          %s184 = sand.u32 %s70, 1
          %s185 = scalar_lea.sflag [#allocation6], %s184
          %s186 = sand.u32 %s70, 1
          %s187 = smul.addr %s186, 8
          %s188 = scalar_lea.vmem [#allocation5], %s187
          %190 = vsyncadd %s185, 0
          %s191 = smul.addr %s29, 2
          %s192 = smul.addr %s191, 4
          %s193 = scalar_lea.hbm %s1, %s192
          %s195 = sshll.u32 %s193, 4
          %s196 = int_to_ptr.hbm [resolvable:$true] %s195
          %s197 = sshll.u32 %s188, 4
          %s198 = int_to_ptr.vmem [resolvable:$true] %s197
          %200 = dma.hbm_to_vmem [thread:$0]  %s196, 128, %s198, %s185
        $region24: #{tpu_custom_call.1} parent=15 // pred_fallthru
          _
      $region16: #{tpu_custom_call.1} parent=5 // pred_fallthru
        _
      %p201 = scmp.le.s32.totalorder 1, %s22
      %p202 = scmp.lt.s32.totalorder %s22, 5
      %p203 = pnand %p201, %p202
      %p204 = pneg %p203
      // Predicated region
      $region25: #{tpu_custom_call.1} parent=5 // pred_check
        _
      $region26: #{tpu_custom_call.1} parent=5 // pred_check_branch
        %206 = sbr.rel (%p203) target = $region28
      $region27: #{tpu_custom_call.1} parent=5 // pred_region
        %s207 = ssub.s32 %s22, 1
        %s208 = sand.u32 %s47, 1
        %s209 = scalar_lea.sflag [#allocation3], %s208
        %s210 = sand.u32 %s47, 1
        %s211 = smul.addr %s210, 8
        %s212 = scalar_lea.vmem [#allocation2], %s211
        // Predicated region
        $region29: #{tpu_custom_call.1} parent=27 // pred_check
          %p213 = pneg %p60
        $region30: #{tpu_custom_call.1} parent=27 // pred_check_branch
          %215 = sbr.rel (%p213) target = $region32
        $region31: #{tpu_custom_call.1} parent=27 // pred_region
          %217 = dma.done %s209, 128
        $region32: #{tpu_custom_call.1} parent=27 // pred_fallthru
          _
        %s218 = sand.u32 %s73, 1
        %s219 = scalar_lea.sflag [#allocation6], %s218
        %s220 = sand.u32 %s73, 1
        %s221 = smul.addr %s220, 8
        %s222 = scalar_lea.vmem [#allocation5], %s221
        // Predicated region
        $region33: #{tpu_custom_call.1} parent=27 // pred_check
          %p223 = pneg %p86
        $region34: #{tpu_custom_call.1} parent=27 // pred_check_branch
          %225 = sbr.rel (%p223) target = $region36
        $region35: #{tpu_custom_call.1} parent=27 // pred_region
          %227 = dma.done %s219, 128
        $region36: #{tpu_custom_call.1} parent=27 // pred_fallthru
          _
        %s228 = sand.u32 %s47, 1
        %s229 = scalar_lea.sflag [#allocation3], %s228
        %s230 = sand.u32 %s47, 1
        %s231 = smul.addr %s230, 8
        %s232 = scalar_lea.vmem [#allocation2], %s231
        %p233 = pneg %p60
        %p234 = pneg %p57
        %s235 = sand.u32 %s73, 1
        %s236 = scalar_lea.sflag [#allocation6], %s235
        %s237 = sand.u32 %s73, 1
        %s238 = smul.addr %s237, 8
        %s239 = scalar_lea.vmem [#allocation5], %s238
        %p240 = pneg %p86
        %p241 = pneg %p83
        %p242 = pneg %p114
        %p243 = pneg %p111
        %s244 = sand.u32 %s101, 1
        %s245 = scalar_lea.sflag [#allocation4], %s244
        %s246 = sand.u32 %s101, 1
        %s247 = smul.addr %s246, 256
        %s248 = scalar_lea.vmem [#allocation7], %s247
        %p249 = pneg %p142
        %p250 = pneg %p139
        %s251 = sand.u32 %s129, 1
        %s252 = scalar_lea.sflag [#allocation9], %s251
        %s253 = sand.u32 %s129, 1
        %s254 = smul.addr %s253, 8
        %s255 = scalar_lea.vmem [#allocation8], %s254
        %s256 = smul.u32 16, %s32
        %s258 = smul.u32 %s32, 128
        %v259 = vld [vmem:[%s212] sm:$0xff]
        %s260 = sshra.s32 %s258, 7
        %s261 = sand.u32 %s258, 127
        %s262 = smul.addr %s260, 4
        %s263 = scalar_lea.vmem %s212, %s262 [#allocation2]
        %v264 = vld [vmem:[%s263] sm:$0xf]
        %265 = vxpose.xlu0.c.b16.start [1/8] %v264, 128
        %266 = vxpose.xlu0.c.b16.cont [2/8] 0, 128
        %267 = vxpose.xlu0.c.b16.cont [3/8] 0, 128
        %268 = vxpose.xlu0.c.b16.cont [4/8] 0, 128
        %269 = vxpose.xlu0.c.b16.cont [5/8] 0, 128
        %270 = vxpose.xlu0.c.b16.cont [6/8] 0, 128
        %271 = vxpose.xlu0.c.b16.cont [7/8] 0, 128
        %272 = vxpose.xlu0.c.b16.end [8/8] 0, 128
        %v273 = vpop.trf.xlu0
        %v274 = vpop.trf.xlu0
        %v275 = vpop.trf.xlu0
        %v276 = vpop.trf.xlu0
        %v277 = vpop.trf.xlu0
        %v278 = vpop.trf.xlu0
        %v279 = vpop.trf.xlu0
        %v280 = vpop.trf.xlu0
        %v282 = vunpack.c.l.b16 %v259
        %v283 = vunpack.c.h.b16 %v259
        %v284 = vpack.c.b16 %v282, %v282
        %v285 = vpack.c.b16 %v283, %v283
        %vm286 = vcmask 64512
        %v288 = vsel %vm286, %v273, 0
        %v291 = vsel %vm286, %v274, 0
        %v294 = vsel %vm286, %v275, 0
        %v297 = vsel %vm286, %v276, 0
        %v300 = vsel %vm286, %v277, 0
        %v303 = vsel %vm286, %v278, 0
        %v306 = vsel %vm286, %v279, 0
        %v309 = vsel %vm286, %v280, 0
        %vm311 = vcmask 1043456
        %v313 = vsel %vm311, %v284, 0
        %v316 = vsel %vm311, %v285, 0
        %318 = vmatpush.bf16.msra.mxu0 0
        %319 = vmatpush.bf16.msra.mxu0 0
        %320 = vmatpush.bf16.msra.mxu0 0
        %321 = vmatpush.bf16.msra.mxu0 0
        %322 = vmatpush.bf16.msra.mxu0 0
        %323 = vmatpush.bf16.msra.mxu0 0
        %324 = vmatpush.bf16.msra.mxu0 0
        %325 = vmatpush.bf16.msra.mxu0 %v313
        %326 = vmatmul.bf16.gmra.mxu0 %v288
        %v327 = vpop.f32.mrf.mxu0
        %v328 = vadd.f32 0.0, %v327
        %v329 = vpop.f32.mrf.mxu0
        %v330 = vadd.f32 0.0, %v329
        %331 = vmatmul.bf16.gmra.mxu0 %v291
        %v332 = vpop.f32.mrf.mxu0
        %v333 = vadd.f32 0.0, %v332
        %v334 = vpop.f32.mrf.mxu0
        %v335 = vadd.f32 0.0, %v334
        %336 = vmatmul.bf16.gmra.mxu0 %v294
        %v337 = vpop.f32.mrf.mxu0
        %v338 = vadd.f32 0.0, %v337
        %v339 = vpop.f32.mrf.mxu0
        %v340 = vadd.f32 0.0, %v339
        %341 = vmatmul.bf16.gmra.mxu0 %v297
        %v342 = vpop.f32.mrf.mxu0
        %v343 = vadd.f32 0.0, %v342
        %v344 = vpop.f32.mrf.mxu0
        %v345 = vadd.f32 0.0, %v344
        %346 = vmatmul.bf16.gmra.mxu0 %v300
        %v347 = vpop.f32.mrf.mxu0
        %v348 = vadd.f32 0.0, %v347
        %v349 = vpop.f32.mrf.mxu0
        %v350 = vadd.f32 0.0, %v349
        %351 = vmatmul.bf16.gmra.mxu0 %v303
        %v352 = vpop.f32.mrf.mxu0
        %v353 = vadd.f32 0.0, %v352
        %v354 = vpop.f32.mrf.mxu0
        %v355 = vadd.f32 0.0, %v354
        %356 = vmatmul.bf16.gmra.mxu0 %v306
        %v357 = vpop.f32.mrf.mxu0
        %v358 = vadd.f32 0.0, %v357
        %v359 = vpop.f32.mrf.mxu0
        %v360 = vadd.f32 0.0, %v359
        %361 = vmatmul.bf16.gmra.mxu0 %v309
        %v362 = vpop.f32.mrf.mxu0
        %v363 = vadd.f32 0.0, %v362
        %v364 = vpop.f32.mrf.mxu0
        %v365 = vadd.f32 0.0, %v364
        %366 = vdwg.mxu0
        %367 = vmatpush.bf16.msra.mxu0 0
        %368 = vmatpush.bf16.msra.mxu0 0
        %369 = vmatpush.bf16.msra.mxu0 0
        %370 = vmatpush.bf16.msra.mxu0 0
        %371 = vmatpush.bf16.msra.mxu0 0
        %372 = vmatpush.bf16.msra.mxu0 0
        %373 = vmatpush.bf16.msra.mxu0 0
        %374 = vmatpush.bf16.msra.mxu0 %v316
        %375 = vmatmul.bf16.gmra.mxu0 %v288
        %v376 = vpop.f32.mrf.mxu0
        %v377 = vadd.f32 0.0, %v376
        %v378 = vpop.f32.mrf.mxu0
        %v379 = vadd.f32 0.0, %v378
        %380 = vmatmul.bf16.gmra.mxu0 %v291
        %v381 = vpop.f32.mrf.mxu0
        %v382 = vadd.f32 0.0, %v381
        %v383 = vpop.f32.mrf.mxu0
        %v384 = vadd.f32 0.0, %v383
        %385 = vmatmul.bf16.gmra.mxu0 %v294
        %v386 = vpop.f32.mrf.mxu0
        %v387 = vadd.f32 0.0, %v386
        %v388 = vpop.f32.mrf.mxu0
        %v389 = vadd.f32 0.0, %v388
        %390 = vmatmul.bf16.gmra.mxu0 %v297
        %v391 = vpop.f32.mrf.mxu0
        %v392 = vadd.f32 0.0, %v391
        %v393 = vpop.f32.mrf.mxu0
        %v394 = vadd.f32 0.0, %v393
        %395 = vmatmul.bf16.gmra.mxu0 %v300
        %v396 = vpop.f32.mrf.mxu0
        %v397 = vadd.f32 0.0, %v396
        %v398 = vpop.f32.mrf.mxu0
        %v399 = vadd.f32 0.0, %v398
        %400 = vmatmul.bf16.gmra.mxu0 %v303
        %v401 = vpop.f32.mrf.mxu0
        %v402 = vadd.f32 0.0, %v401
        %v403 = vpop.f32.mrf.mxu0
        %v404 = vadd.f32 0.0, %v403
        %405 = vmatmul.bf16.gmra.mxu0 %v306
        %v406 = vpop.f32.mrf.mxu0
        %v407 = vadd.f32 0.0, %v406
        %v408 = vpop.f32.mrf.mxu0
        %v409 = vadd.f32 0.0, %v408
        %410 = vmatmul.bf16.gmra.mxu0 %v309
        %v411 = vpop.f32.mrf.mxu0
        %v412 = vadd.f32 0.0, %v411
        %v413 = vpop.f32.mrf.mxu0
        %v414 = vadd.f32 0.0, %v413
        %415 = vdwg.mxu0
        %v416 = vmax.f32 %v328, %v377
        %417 = vmax.xlane.f32.xlu0 %v416
        %v418 = vpop.xlane.xlu0 %417
        %v419 = vmax.f32 %v330, %v379
        %420 = vmax.xlane.f32.xlu0 %v419
        %v421 = vpop.xlane.xlu0 %420
        %v422 = vmax.f32 %v333, %v382
        %423 = vmax.xlane.f32.xlu0 %v422
        %v424 = vpop.xlane.xlu0 %423
        %v425 = vmax.f32 %v335, %v384
        %426 = vmax.xlane.f32.xlu0 %v425
        %v427 = vpop.xlane.xlu0 %426
        %v428 = vmax.f32 %v338, %v387
        %429 = vmax.xlane.f32.xlu0 %v428
        %v430 = vpop.xlane.xlu0 %429
        %v431 = vmax.f32 %v340, %v389
        %432 = vmax.xlane.f32.xlu0 %v431
        %v433 = vpop.xlane.xlu0 %432
        %v434 = vmax.f32 %v343, %v392
        %435 = vmax.xlane.f32.xlu0 %v434
        %v436 = vpop.xlane.xlu0 %435
        %v437 = vmax.f32 %v345, %v394
        %438 = vmax.xlane.f32.xlu0 %v437
        %v439 = vpop.xlane.xlu0 %438
        %v440 = vmax.f32 %v348, %v397
        %441 = vmax.xlane.f32.xlu0 %v440
        %v442 = vpop.xlane.xlu0 %441
        %v443 = vmax.f32 %v350, %v399
        %444 = vmax.xlane.f32.xlu0 %v443
        %v445 = vpop.xlane.xlu0 %444
        %v446 = vmax.f32 %v353, %v402
        %447 = vmax.xlane.f32.xlu0 %v446
        %v448 = vpop.xlane.xlu0 %447
        %v449 = vmax.f32 %v355, %v404
        %450 = vmax.xlane.f32.xlu0 %v449
        %v451 = vpop.xlane.xlu0 %450
        %v452 = vmax.f32 %v358, %v407
        %453 = vmax.xlane.f32.xlu0 %v452
        %v454 = vpop.xlane.xlu0 %453
        %v455 = vmax.f32 %v360, %v409
        %456 = vmax.xlane.f32.xlu0 %v455
        %v457 = vpop.xlane.xlu0 %456
        %v458 = vmax.f32 %v363, %v412
        %459 = vmax.xlane.f32.xlu0 %v458
        %v460 = vpop.xlane.xlu0 %459
        %v461 = vmax.f32 %v365, %v414
        %462 = vmax.xlane.f32.xlu0 %v461
        %v463 = vpop.xlane.xlu0 %462
        %v464 = vsub.f32 %v328, %v418
        %v465 = vsub.f32 %v377, %v418
        %v466 = vsub.f32 %v330, %v421
        %v467 = vsub.f32 %v379, %v421
        %v468 = vsub.f32 %v333, %v424
        %v469 = vsub.f32 %v382, %v424
        %v470 = vsub.f32 %v335, %v427
        %v471 = vsub.f32 %v384, %v427
        %v472 = vsub.f32 %v338, %v430
        %v473 = vsub.f32 %v387, %v430
        %v474 = vsub.f32 %v340, %v433
        %v475 = vsub.f32 %v389, %v433
        %v476 = vsub.f32 %v343, %v436
        %v477 = vsub.f32 %v392, %v436
        %v478 = vsub.f32 %v345, %v439
        %v479 = vsub.f32 %v394, %v439
        %v480 = vsub.f32 %v348, %v442
        %v481 = vsub.f32 %v397, %v442
        %v482 = vsub.f32 %v350, %v445
        %v483 = vsub.f32 %v399, %v445
        %v484 = vsub.f32 %v353, %v448
        %v485 = vsub.f32 %v402, %v448
        %v486 = vsub.f32 %v355, %v451
        %v487 = vsub.f32 %v404, %v451
        %v488 = vsub.f32 %v358, %v454
        %v489 = vsub.f32 %v407, %v454
        %v490 = vsub.f32 %v360, %v457
        %v491 = vsub.f32 %v409, %v457
        %v492 = vsub.f32 %v363, %v460
        %v493 = vsub.f32 %v412, %v460
        %v494 = vsub.f32 %v365, %v463
        %v495 = vsub.f32 %v414, %v463
        %v496 = vmul.f32 %v464, 1.442695
        %v497 = vpow.pop %v496
        %v498 = vmul.f32 %v465, 1.442695
        %v499 = vpow.pop %v498
        %v500 = vmul.f32 %v466, 1.442695
        %v501 = vpow.pop %v500
        %v502 = vmul.f32 %v467, 1.442695
        %v503 = vpow.pop %v502
        %v504 = vmul.f32 %v468, 1.442695
        %v505 = vpow.pop %v504
        %v506 = vmul.f32 %v469, 1.442695
        %v507 = vpow.pop %v506
        %v508 = vmul.f32 %v470, 1.442695
        %v509 = vpow.pop %v508
        %v510 = vmul.f32 %v471, 1.442695
        %v511 = vpow.pop %v510
        %v512 = vmul.f32 %v472, 1.442695
        %v513 = vpow.pop %v512
        %v514 = vmul.f32 %v473, 1.442695
        %v515 = vpow.pop %v514
        %v516 = vmul.f32 %v474, 1.442695
        %v517 = vpow.pop %v516
        %v518 = vmul.f32 %v475, 1.442695
        %v519 = vpow.pop %v518
        %v520 = vmul.f32 %v476, 1.442695
        %v521 = vpow.pop %v520
        %v522 = vmul.f32 %v477, 1.442695
        %v523 = vpow.pop %v522
        %v524 = vmul.f32 %v478, 1.442695
        %v525 = vpow.pop %v524
        %v526 = vmul.f32 %v479, 1.442695
        %v527 = vpow.pop %v526
        %v528 = vmul.f32 %v480, 1.442695
        %v529 = vpow.pop %v528
        %v530 = vmul.f32 %v481, 1.442695
        %v531 = vpow.pop %v530
        %v532 = vmul.f32 %v482, 1.442695
        %v533 = vpow.pop %v532
        %v534 = vmul.f32 %v483, 1.442695
        %v535 = vpow.pop %v534
        %v536 = vmul.f32 %v484, 1.442695
        %v537 = vpow.pop %v536
        %v538 = vmul.f32 %v485, 1.442695
        %v539 = vpow.pop %v538
        %v540 = vmul.f32 %v486, 1.442695
        %v541 = vpow.pop %v540
        %v542 = vmul.f32 %v487, 1.442695
        %v543 = vpow.pop %v542
        %v544 = vmul.f32 %v488, 1.442695
        %v545 = vpow.pop %v544
        %v546 = vmul.f32 %v489, 1.442695
        %v547 = vpow.pop %v546
        %v548 = vmul.f32 %v490, 1.442695
        %v549 = vpow.pop %v548
        %v550 = vmul.f32 %v491, 1.442695
        %v551 = vpow.pop %v550
        %v552 = vmul.f32 %v492, 1.442695
        %v553 = vpow.pop %v552
        %v554 = vmul.f32 %v493, 1.442695
        %v555 = vpow.pop %v554
        %v556 = vmul.f32 %v494, 1.442695
        %v557 = vpow.pop %v556
        %v558 = vmul.f32 %v495, 1.442695
        %v559 = vpow.pop %v558
        %v560 = vadd.f32 %v497, %v499
        %561 = vadd.xlane.f32.xlu0 %v560
        %v562 = vpop.xlane.xlu0 %561
        %v563 = vadd.f32 %v501, %v503
        %564 = vadd.xlane.f32.xlu0 %v563
        %v565 = vpop.xlane.xlu0 %564
        %v566 = vadd.f32 %v505, %v507
        %567 = vadd.xlane.f32.xlu0 %v566
        %v568 = vpop.xlane.xlu0 %567
        %v569 = vadd.f32 %v509, %v511
        %570 = vadd.xlane.f32.xlu0 %v569
        %v571 = vpop.xlane.xlu0 %570
        %v572 = vadd.f32 %v513, %v515
        %573 = vadd.xlane.f32.xlu0 %v572
        %v574 = vpop.xlane.xlu0 %573
        %v575 = vadd.f32 %v517, %v519
        %576 = vadd.xlane.f32.xlu0 %v575
        %v577 = vpop.xlane.xlu0 %576
        %v578 = vadd.f32 %v521, %v523
        %579 = vadd.xlane.f32.xlu0 %v578
        %v580 = vpop.xlane.xlu0 %579
        %v581 = vadd.f32 %v525, %v527
        %582 = vadd.xlane.f32.xlu0 %v581
        %v583 = vpop.xlane.xlu0 %582
        %v584 = vadd.f32 %v529, %v531
        %585 = vadd.xlane.f32.xlu0 %v584
        %v586 = vpop.xlane.xlu0 %585
        %v587 = vadd.f32 %v533, %v535
        %588 = vadd.xlane.f32.xlu0 %v587
        %v589 = vpop.xlane.xlu0 %588
        %v590 = vadd.f32 %v537, %v539
        %591 = vadd.xlane.f32.xlu0 %v590
        %v592 = vpop.xlane.xlu0 %591
        %v593 = vadd.f32 %v541, %v543
        %594 = vadd.xlane.f32.xlu0 %v593
        %v595 = vpop.xlane.xlu0 %594
        %v596 = vadd.f32 %v545, %v547
        %597 = vadd.xlane.f32.xlu0 %v596
        %v598 = vpop.xlane.xlu0 %597
        %v599 = vadd.f32 %v549, %v551
        %600 = vadd.xlane.f32.xlu0 %v599
        %v601 = vpop.xlane.xlu0 %600
        %v602 = vadd.f32 %v553, %v555
        %603 = vadd.xlane.f32.xlu0 %v602
        %v604 = vpop.xlane.xlu0 %603
        %v605 = vadd.f32 %v557, %v559
        %606 = vadd.xlane.f32.xlu0 %v605
        %v607 = vpop.xlane.xlu0 %606
        %v608 = vrcp.pop %v562
        %v609 = vrcp.pop %v565
        %v610 = vrcp.pop %v568
        %v611 = vrcp.pop %v571
        %v612 = vrcp.pop %v574
        %v613 = vrcp.pop %v577
        %v614 = vrcp.pop %v580
        %v615 = vrcp.pop %v583
        %v616 = vrcp.pop %v586
        %v617 = vrcp.pop %v589
        %v618 = vrcp.pop %v592
        %v619 = vrcp.pop %v595
        %v620 = vrcp.pop %v598
        %v621 = vrcp.pop %v601
        %v622 = vrcp.pop %v604
        %v623 = vrcp.pop %v607
        %v624 = vmul.f32 %v497, %v608
        %v625 = vmul.f32 %v499, %v608
        %v626 = vmul.f32 %v501, %v609
        %v627 = vmul.f32 %v503, %v609
        %v628 = vmul.f32 %v505, %v610
        %v629 = vmul.f32 %v507, %v610
        %v630 = vmul.f32 %v509, %v611
        %v631 = vmul.f32 %v511, %v611
        %v632 = vmul.f32 %v513, %v612
        %v633 = vmul.f32 %v515, %v612
        %v634 = vmul.f32 %v517, %v613
        %v635 = vmul.f32 %v519, %v613
        %v636 = vmul.f32 %v521, %v614
        %v637 = vmul.f32 %v523, %v614
        %v638 = vmul.f32 %v525, %v615
        %v639 = vmul.f32 %v527, %v615
        %v640 = vmul.f32 %v529, %v616
        %v641 = vmul.f32 %v531, %v616
        %v642 = vmul.f32 %v533, %v617
        %v643 = vmul.f32 %v535, %v617
        %v644 = vmul.f32 %v537, %v618
        %v645 = vmul.f32 %v539, %v618
        %v646 = vmul.f32 %v541, %v619
        %v647 = vmul.f32 %v543, %v619
        %v648 = vmul.f32 %v545, %v620
        %v649 = vmul.f32 %v547, %v620
        %v650 = vmul.f32 %v549, %v621
        %v651 = vmul.f32 %v551, %v621
        %v652 = vmul.f32 %v553, %v622
        %v653 = vmul.f32 %v555, %v622
        %v654 = vmul.f32 %v557, %v623
        %v655 = vmul.f32 %v559, %v623
        %656 = vst [vmem:[%s248] sm:$0xff] %v624
        %657 = vst [vmem:[%s248 + $0x8] sm:$0xff] %v625
        %658 = vst [vmem:[%s248 + $0x10] sm:$0xff] %v626
        %659 = vst [vmem:[%s248 + $0x18] sm:$0xff] %v627
        %660 = vst [vmem:[%s248 + $0x20] sm:$0xff] %v628
        %661 = vst [vmem:[%s248 + $0x28] sm:$0xff] %v629
        %662 = vst [vmem:[%s248 + $0x30] sm:$0xff] %v630
        %663 = vst [vmem:[%s248 + $0x38] sm:$0xff] %v631
        %664 = vst [vmem:[%s248 + $0x40] sm:$0xff] %v632
        %665 = vst [vmem:[%s248 + $0x48] sm:$0xff] %v633
        %666 = vst [vmem:[%s248 + $0x50] sm:$0xff] %v634
        %667 = vst [vmem:[%s248 + $0x58] sm:$0xff] %v635
        %668 = vst [vmem:[%s248 + $0x60] sm:$0xff] %v636
        %669 = vst [vmem:[%s248 + $0x68] sm:$0xff] %v637
        %670 = vst [vmem:[%s248 + $0x70] sm:$0xff] %v638
        %671 = vst [vmem:[%s248 + $0x78] sm:$0xff] %v639
        %672 = vst [vmem:[%s248 + $0x80] sm:$0xff] %v640
        %673 = vst [vmem:[%s248 + $0x88] sm:$0xff] %v641
        %674 = vst [vmem:[%s248 + $0x90] sm:$0xff] %v642
        %675 = vst [vmem:[%s248 + $0x98] sm:$0xff] %v643
        %676 = vst [vmem:[%s248 + $0xa0] sm:$0xff] %v644
        %677 = vst [vmem:[%s248 + $0xa8] sm:$0xff] %v645
        %678 = vst [vmem:[%s248 + $0xb0] sm:$0xff] %v646
        %679 = vst [vmem:[%s248 + $0xb8] sm:$0xff] %v647
        %680 = vst [vmem:[%s248 + $0xc0] sm:$0xff] %v648
        %681 = vst [vmem:[%s248 + $0xc8] sm:$0xff] %v649
        %682 = vst [vmem:[%s248 + $0xd0] sm:$0xff] %v650
        %683 = vst [vmem:[%s248 + $0xd8] sm:$0xff] %v651
        %684 = vst [vmem:[%s248 + $0xe0] sm:$0xff] %v652
        %685 = vst [vmem:[%s248 + $0xe8] sm:$0xff] %v653
        %686 = vst [vmem:[%s248 + $0xf0] sm:$0xff] %v654
        %687 = vst [vmem:[%s248 + $0xf8] sm:$0xff] %v655
        %v688 = vld [vmem:[%s222] sm:$0xff]
        %v689 = vpack.c.bf16 %v626, %v624
        %v690 = vpack.c.bf16 %v627, %v625
        %v691 = vpack.c.bf16 %v630, %v628
        %v692 = vpack.c.bf16 %v631, %v629
        %v693 = vpack.c.bf16 %v634, %v632
        %v694 = vpack.c.bf16 %v635, %v633
        %v695 = vpack.c.bf16 %v638, %v636
        %v696 = vpack.c.bf16 %v639, %v637
        %v697 = vpack.c.bf16 %v642, %v640
        %v698 = vpack.c.bf16 %v643, %v641
        %v699 = vpack.c.bf16 %v646, %v644
        %v700 = vpack.c.bf16 %v647, %v645
        %v701 = vpack.c.bf16 %v650, %v648
        %v702 = vpack.c.bf16 %v651, %v649
        %v703 = vpack.c.bf16 %v654, %v652
        %v704 = vpack.c.bf16 %v655, %v653
        %v706 = vunpack.c.l.b16 %v688
        %v707 = vunpack.c.h.b16 %v688
        %v708 = vpack.c.b16 %v706, %v706
        %v709 = vpack.c.b16 %v707, %v707
        %712 = vmatpush.bf16.xpose.msra.mxu0 %v703
        %713 = vmatpush.bf16.xpose.msra.mxu0 %v701
        %714 = vmatpush.bf16.xpose.msra.mxu0 %v699
        %715 = vmatpush.bf16.xpose.msra.mxu0 %v697
        %716 = vmatpush.bf16.xpose.msra.mxu0 %v695
        %717 = vmatpush.bf16.xpose.msra.mxu0 %v693
        %718 = vmatpush.bf16.xpose.msra.mxu0 %v691
        %719 = vmatpush.bf16.xpose.msra.mxu0 %v689
        %720 = vmatmul.bf16.gmra.mxu0 %v708
        %v721 = vpop.f32.mrf.mxu0
        %v722 = vadd.f32 0.0, %v721
        %v723 = vpop.f32.mrf.mxu0
        %724 = vdwg.mxu0
        %725 = vmatpush.bf16.xpose.msra.mxu0 %v704
        %726 = vmatpush.bf16.xpose.msra.mxu0 %v702
        %727 = vmatpush.bf16.xpose.msra.mxu0 %v700
        %728 = vmatpush.bf16.xpose.msra.mxu0 %v698
        %729 = vmatpush.bf16.xpose.msra.mxu0 %v696
        %730 = vmatpush.bf16.xpose.msra.mxu0 %v694
        %731 = vmatpush.bf16.xpose.msra.mxu0 %v692
        %732 = vmatpush.bf16.xpose.msra.mxu0 %v690
        %733 = vmatmul.bf16.gmra.mxu0 %v709
        %v734 = vpop.f32.mrf.mxu0
        %v735 = vadd.f32 %v722, %v734
        %v736 = vpop.f32.mrf.mxu0
        %737 = vdwg.mxu0
        %738 = vst [vmem:[%s255] sm:$0xff] %v735
        %s739 = sand.u32 %s101, 1
        %s740 = scalar_lea.sflag [#allocation4], %s739
        %s741 = sand.u32 %s101, 1
        %s742 = smul.addr %s741, 256
        %s743 = scalar_lea.vmem [#allocation7], %s742
        %s744 = sand.u32 %s129, 1
        %s745 = scalar_lea.sflag [#allocation9], %s744
        %s746 = sand.u32 %s129, 1
        %s747 = smul.addr %s746, 8
        %s748 = scalar_lea.vmem [#allocation8], %s747
        // Predicated region
        $region37: #{tpu_custom_call.1} parent=27 // pred_check
          %p749 = pneg %p111
        $region38: #{tpu_custom_call.1} parent=27 // pred_check_branch
          %751 = sbr.rel (%p749) target = $region40
        $region39: #{tpu_custom_call.1} parent=27 // pred_region
          %s752 = smul.u32 16, %s32
          %754 = vsyncadd %s740, 0
          %s755 = smul.addr %s752, 2
          %s756 = smul.addr %s31, 64
          %s757 = sadd.s32 %s755, %s756
          %s758 = smul.addr %s757, 8
          %s759 = scalar_lea.hbm %s2, %s758
          %s760 = sshll.u32 %s743, 4
          %s761 = int_to_ptr.vmem [resolvable:$true] %s760
          %s762 = sshll.u32 %s759, 4
          %s763 = int_to_ptr.hbm [resolvable:$true] %s762
          %768 = dma.vmem_to_hbm [thread:$0]  %s761, 4096, %s763, %s740, 256, 256, 16
        $region40: #{tpu_custom_call.1} parent=27 // pred_fallthru
          _
        // Predicated region
        $region41: #{tpu_custom_call.1} parent=27 // pred_check
          %p769 = pneg %p139
        $region42: #{tpu_custom_call.1} parent=27 // pred_check_branch
          %771 = sbr.rel (%p769) target = $region44
        $region43: #{tpu_custom_call.1} parent=27 // pred_region
          %773 = vsyncadd %s745, 0
          %s774 = smul.addr %s31, 2
          %s775 = sadd.s32 %s32, %s774
          %s776 = smul.addr %s775, 8
          %s777 = scalar_lea.hbm %s3, %s776
          %s779 = sshll.u32 %s748, 4
          %s780 = int_to_ptr.vmem [resolvable:$true] %s779
          %s781 = sshll.u32 %s777, 4
          %s782 = int_to_ptr.hbm [resolvable:$true] %s781
          %784 = dma.vmem_to_hbm [thread:$0]  %s780, 128, %s782, %s745
        $region44: #{tpu_custom_call.1} parent=27 // pred_fallthru
          _
      $region28: #{tpu_custom_call.1} parent=5 // pred_fallthru
        _
      %p785 = scmp.le.s32.totalorder 2, %s22
      // Predicated region
      $region45: #{tpu_custom_call.1} parent=5 // pred_check
        %p786 = pneg %p785
      $region46: #{tpu_custom_call.1} parent=5 // pred_check_branch
        %788 = sbr.rel (%p786) target = $region48
      $region47: #{tpu_custom_call.1} parent=5 // pred_region
        %s789 = ssub.s32 %s22, 2
        // Predicated region
        $region49: #{tpu_custom_call.1} parent=47 // pred_check
          %p790 = pneg %p117
        $region50: #{tpu_custom_call.1} parent=47 // pred_check_branch
          %792 = sbr.rel (%p790) target = $region52
        $region51: #{tpu_custom_call.1} parent=47 // pred_region
          %s793 = sand.u32 %s102, 1
          %s794 = scalar_lea.sflag [#allocation4], %s793
          %s795 = sand.u32 %s102, 1
          %s796 = smul.addr %s795, 256
          %s797 = scalar_lea.vmem [#allocation7], %s796
          %799 = dma.done %s794, 4096
        $region52: #{tpu_custom_call.1} parent=47 // pred_fallthru
          _
        // Predicated region
        $region53: #{tpu_custom_call.1} parent=47 // pred_check
          %p800 = pneg %p145
        $region54: #{tpu_custom_call.1} parent=47 // pred_check_branch
          %802 = sbr.rel (%p800) target = $region56
        $region55: #{tpu_custom_call.1} parent=47 // pred_region
          %s803 = sand.u32 %s130, 1
          %s804 = scalar_lea.sflag [#allocation9], %s803
          %s805 = sand.u32 %s130, 1
          %s806 = smul.addr %s805, 8
          %s807 = scalar_lea.vmem [#allocation8], %s806
          %809 = dma.done %s804, 128
        $region56: #{tpu_custom_call.1} parent=47 // pred_fallthru
          _
      $region48: #{tpu_custom_call.1} parent=5 // pred_fallthru
        _
    $region6: #{tpu_custom_call.1} parent=1 // loop_footer
      %s26 = sadd.s32 1, %s22
    $region7: #{tpu_custom_call.1} parent=1 // loop_footer_branch
      %21 = sbr.rel target = $region3
    $region8: #{tpu_custom_call.1} parent=1 // loop_exit
      _
    %810 = vsyncpa [#allocation3], 1
    %s811 = scalar_lea.sflag [#allocation3], 1
    %812 = vsyncpa %s811, 1
    %813 = vsyncpa [#allocation6], 1
    %s814 = scalar_lea.sflag [#allocation6], 1
    %815 = vsyncpa %s814, 1
    %816 = vsyncpa [#allocation4], 1
    %s817 = scalar_lea.sflag [#allocation4], 1
    %818 = vsyncpa %s817, 1
    %819 = vsyncpa [#allocation9], 1
    %s820 = scalar_lea.sflag [#allocation9], 1
    %821 = vsyncpa %s820, 1

</llo_original>
